<compile_context>
chip_gen: v5e
topology: v5e:2x2
jax: 0.10.0
libtpu: 0.0.40
codegen_flags: <defaults>
</compile_context>

<pallas_src>
import functools

import jax
import jax.numpy as jnp
from jax.experimental import pallas as pl
from jax.experimental.pallas import tpu as pltpu


# ----------------------------- kernel ---------------------------------------


def make_fused_kernel(N, D, HW, eps):
    """Fused Conv3d(3,1,1) + BatchNorm3d(train) + ReLU over the whole batch."""
    DHW = D * HW
    NDHW = N * DHW

    def kernel(x_ref, w_ref, pbn_ref, o_ref):
        # x_ref:   (Cin_pad, N*DHW)  lane-dense, samples concatenated on lanes
        # w_ref:   (3, Cout, Cin_pad) conv taps [w(d-1), w(d), w(d+1)]
        # pbn_ref: (3, Cout, 1)       packed [bias, gamma, beta]
        # o_ref:   (Cout, N*DHW)
        x = x_ref[...]                                            # f32

        # Position of each lane inside its own sample (0 .. DHW-1).
        lane = jax.lax.broadcasted_iota(jnp.int32, x.shape, 1)
        pos = lane % DHW

        # Temporal shift by one frame == lane roll by +-HW (XLU slot), with the
        # first / last frame of every sample zeroed (VPU select).  Wraparound
        # across samples only hits masked lanes, so it is harmless.
        x_prev = jnp.where(pos >= HW, pltpu.roll(x, HW, axis=1), 0.0)
        x_next = jnp.where(pos < DHW - HW, pltpu.roll(x, NDHW - HW, axis=1), 0.0)

        b, gamma, beta = pbn_ref[0], pbn_ref[1], pbn_ref[2]       # (Cout, 1)

        # Conv: three small MXU dots fused over the whole batch (256-lane RHS),
        # accumulated in f32.
        y = (jnp.dot(w_ref[0], x_prev, preferred_element_type=jnp.float32)
             + jnp.dot(w_ref[1], x, preferred_element_type=jnp.float32)
             + jnp.dot(w_ref[2], x_next, preferred_element_type=jnp.float32)
             + b)                                                 # (Cout, NDHW)

        # BatchNorm (training mode): biased variance via centered sum-of-squares.
        inv_count = 1.0 / float(NDHW)
        mean = y.sum(axis=1, keepdims=True) * inv_count           # (Cout, 1)
        c = y - mean
        var = (c * c).sum(axis=1, keepdims=True) * inv_count      # (Cout, 1)

        scale = gamma * jax.lax.rsqrt(var + eps)                  # (Cout, 1)
        # normalize + affine + ReLU, one unmasked lane-dense store
        o_ref[...] = jnp.maximum(c * scale + beta, 0.0)

    return kernel


# ----------------------------- wrapper ---------------------------------------


def prepare_params(w, b, gamma, beta):
    """One-time parameter packing (hoisted out of the per-call path).

    w: (3, Cin, Cout) temporal taps.  (A PyTorch Conv3d weight of shape
    (Cout, Cin, 3, 1, 1) corresponds to w[k, ci, co] = w_pt[co, ci, k, 0, 0].)
    b, gamma, beta: (Cout,).
    """
    taps, Cin, Cout = w.shape
    assert taps == 3
    cin_pad = ((Cin + 7) // 8) * 8                                # sublane align
    w_p = jnp.transpose(w, (0, 2, 1)).astype(jnp.float32)         # (3, Cout, Cin)
    w_p = jnp.pad(w_p, ((0, 0), (0, 0), (0, cin_pad - Cin)))      # (3, Cout, Cin_pad)
    pbn = jnp.stack([b, gamma, beta]).astype(jnp.float32).reshape(3, Cout, 1)
    return w_p, pbn


@functools.partial(jax.jit, static_argnames=("eps",))
def transformer_forward(x, w_packed, pbn, eps=1e-5):
    """x: (N, Cin, D, H, W) float32.  Returns (N, Cout, D, H, W) float32."""
    N, Cin, D, H, W = x.shape
    _, Cout, Cin_pad = w_packed.shape
    HW = H * W
    DHW = D * HW
    NDHW = N * DHW

    # Tiny (few-KB) layout change to the lane-dense kernel layout (fused under jit).
    xf = jnp.transpose(x.reshape(N, Cin, DHW).astype(jnp.float32), (1, 0, 2))
    xf = jnp.pad(xf.reshape(Cin, NDHW), ((0, Cin_pad - Cin), (0, 0)))

    out = pl.pallas_call(
        make_fused_kernel(N, D, HW, float(eps)),
        out_shape=jax.ShapeDtypeStruct((Cout, NDHW), jnp.float32),
        in_specs=[pl.BlockSpec(memory_space=pltpu.MemorySpace.VMEM)] * 3,
        out_specs=pl.BlockSpec(memory_space=pltpu.MemorySpace.VMEM),
    )(xf, w_packed, pbn)

    # (Cout, N*DHW) -> (N, Cout, D, H, W): tiny wrapper-side transpose back.
    return jnp.transpose(out.reshape(Cout, N, D, H, W), (1, 0, 2, 3, 4))


# ----------------------------- reference (pure JAX) ---------------------------


def reference_forward(x, w, b, gamma, beta, eps=1e-5):
    N, Cin, D, H, W = x.shape
    Cout = w.shape[2]
    xp = jnp.pad(x, ((0, 0), (0, 0), (1, 1), (0, 0), (0, 0)))
    y = jnp.zeros((N, Cout, D, H, W), jnp.float32)
    for k in range(3):
        y = y + jnp.einsum("ncdhw,co->nodhw", xp[:, :, k:k + D], w[k])
    y = y + b[None, :, None, None, None]
    mean = y.mean(axis=(0, 2, 3, 4), keepdims=True)
    var = ((y - mean) ** 2).mean(axis=(0, 2, 3, 4), keepdims=True)  # biased
    yn = (y - mean) / jnp.sqrt(var + eps)
    yn = yn * gamma[None, :, None, None, None] + beta[None, :, None, None, None]
    return jnp.maximum(yn, 0.0)


# ----------------------------- main -------------------------------------------


if __name__ == "__main__":
    # small shapes consistent with the forward: N=2, Cin(hidden_dim)=4, D=8 frames, H=W=4
    N, Cin, Cout, D, H, W = 2, 4, 8, 8, 4, 4

    key = jax.random.PRNGKey(0)
    kx, kw, kb, kg, kbt = jax.random.split(key, 5)
    x = jax.random.normal(kx, (N, Cin, D, H, W), dtype=jnp.float32)
    # conv weight stored as (taps=3, Cin, Cout); see prepare_params for PyTorch mapping.
    w = jax.random.normal(kw, (3, Cin, Cout), dtype=jnp.float32) * 0.1
    b = jax.random.normal(kb, (Cout,), dtype=jnp.float32) * 0.1
    gamma = 1.0 + 0.1 * jax.random.normal(kg, (Cout,), dtype=jnp.float32)
    beta = 0.1 * jax.random.normal(kbt, (Cout,), dtype=jnp.float32)

    # TODO(synk): nn.Transformer is constructed in __init__ but never used in forward(); not implemented.

    w_packed, pbn = prepare_params(w, b, gamma, beta)   # one-time param prep
    out = transformer_forward(x, w_packed, pbn)
    out = jax.block_until_ready(out)

    ref = reference_forward(x, w, b, gamma, beta)
    assert out.shape == (N, Cout, D, H, W)
    assert jnp.allclose(out, ref, rtol=1e-4, atol=1e-4), "mismatch vs pure-JAX reference"

    print("KERNEL_OK")
</pallas_src>

<mosaic_0001>
module attributes {stable_mosaic.version = 11 : i64} {
  func.func @kernel(%arg0: memref<8x256xf32, #tpu.memory_space<vmem>>, %arg1: memref<3x8x8xf32, #tpu.memory_space<vmem>>, %arg2: memref<3x8x1xf32, #tpu.memory_space<vmem>>, %arg3: memref<8x256xf32, #tpu.memory_space<vmem>>) attributes {dimension_semantics = [], scalar_prefetch = 0 : i64, scratch_operands = 0 : i64, tpu.core_type = #tpu.core_type<tc>} {
    %c0 = arith.constant 0 : index
    %c0_0 = arith.constant 0 : index
    %0 = vector.load %arg0[%c0, %c0_0] : memref<8x256xf32, #tpu.memory_space<vmem>>, vector<8x256xf32>
    %1 = tpu.iota {dimensions = array<i32: 1>} : vector<8x256xi32>
    %c128_i32 = arith.constant 128 : i32
    %c0_i32 = arith.constant 0 : i32
    %2 = arith.cmpi eq, %c128_i32, %c0_i32 : i32
    %c1_i32 = arith.constant 1 : i32
    %3 = arith.select %2, %c1_i32, %c128_i32 : i32
    %4 = vector.broadcast %3 : i32 to vector<8x256xi32>
    %5 = arith.remsi %1, %4 : vector<8x256xi32>
    %c0_i32_1 = arith.constant 0 : i32
    %6 = vector.broadcast %c0_i32_1 : i32 to vector<8x256xi32>
    %7 = arith.cmpi ne, %5, %6 : vector<8x256xi32>
    %c0_i32_2 = arith.constant 0 : i32
    %8 = vector.broadcast %c0_i32_2 : i32 to vector<8x256xi32>
    %9 = arith.cmpi slt, %5, %8 : vector<8x256xi32>
    %c0_i32_3 = arith.constant 0 : i32
    %10 = arith.cmpi slt, %3, %c0_i32_3 : i32
    %11 = vector.broadcast %10 : i1 to vector<8x256xi1>
    %12 = vector.broadcast %11 : vector<8x256xi1> to vector<8x256xi1>
    %13 = arith.xori %9, %12 : vector<8x256xi1>
    %14 = arith.andi %13, %7 : vector<8x256xi1>
    %15 = vector.broadcast %3 : i32 to vector<8x256xi32>
    %16 = arith.addi %5, %15 : vector<8x256xi32>
    %17 = arith.select %14, %16, %5 : vector<8x256xi1>, vector<8x256xi32>
    %c16_i32 = arith.constant 16 : i32
    %18 = vector.broadcast %c16_i32 : i32 to vector<8x256xi32>
    %19 = arith.cmpi sge, %17, %18 : vector<8x256xi32>
    %c16_i32_4 = arith.constant 16 : i32
    %20 = tpu.dynamic_rotate %0 by %c16_i32_4 dim 1 : vector<8x256xf32>, i32 -> vector<8x256xf32>
    %cst = arith.constant 0.000000e+00 : f32
    %21 = vector.broadcast %cst : f32 to vector<8x256xf32>
    %22 = arith.select %19, %20, %21 : vector<8x256xi1>, vector<8x256xf32>
    %c112_i32 = arith.constant 112 : i32
    %23 = vector.broadcast %c112_i32 : i32 to vector<8x256xi32>
    %24 = arith.cmpi slt, %17, %23 : vector<8x256xi32>
    %c240_i32 = arith.constant 240 : i32
    %25 = tpu.dynamic_rotate %0 by %c240_i32 dim 1 : vector<8x256xf32>, i32 -> vector<8x256xf32>
    %cst_5 = arith.constant 0.000000e+00 : f32
    %26 = vector.broadcast %cst_5 : f32 to vector<8x256xf32>
    %27 = arith.select %24, %25, %26 : vector<8x256xi1>, vector<8x256xf32>
    %c0_6 = arith.constant 0 : index
    %c0_7 = arith.constant 0 : index
    %c0_8 = arith.constant 0 : index
    %28 = vector.load %arg2[%c0_6, %c0_7, %c0_8] : memref<3x8x1xf32, #tpu.memory_space<vmem>>, vector<1x8x1xf32>
    %29 = vector.shape_cast %28 : vector<1x8x1xf32> to vector<8x1xf32>
    %c1 = arith.constant 1 : index
    %c0_9 = arith.constant 0 : index
    %c0_10 = arith.constant 0 : index
    %30 = vector.load %arg2[%c1, %c0_9, %c0_10] : memref<3x8x1xf32, #tpu.memory_space<vmem>>, vector<1x8x1xf32>
    %31 = vector.shape_cast %30 : vector<1x8x1xf32> to vector<8x1xf32>
    %c2 = arith.constant 2 : index
    %c0_11 = arith.constant 0 : index
    %c0_12 = arith.constant 0 : index
    %32 = vector.load %arg2[%c2, %c0_11, %c0_12] : memref<3x8x1xf32, #tpu.memory_space<vmem>>, vector<1x8x1xf32>
    %33 = vector.shape_cast %32 : vector<1x8x1xf32> to vector<8x1xf32>
    %c0_13 = arith.constant 0 : index
    %c0_14 = arith.constant 0 : index
    %c0_15 = arith.constant 0 : index
    %34 = vector.load %arg1[%c0_13, %c0_14, %c0_15] : memref<3x8x8xf32, #tpu.memory_space<vmem>>, vector<1x8x8xf32>
    %35 = vector.shape_cast %34 : vector<1x8x8xf32> to vector<8x8xf32>
    %cst_16 = arith.constant dense<0.000000e+00> : vector<8x256xf32>
    %36 = tpu.matmul %35, %22, %cst_16 {dimension_numbers = #tpu.dot_dimension_numbers<[1], [0], [0], [1], [0, 0, 1, 1], [], []>} : vector<8x8xf32>, vector<8x256xf32>, vector<8x256xf32> -> vector<8x256xf32>
    %c1_17 = arith.constant 1 : index
    %c0_18 = arith.constant 0 : index
    %c0_19 = arith.constant 0 : index
    %37 = vector.load %arg1[%c1_17, %c0_18, %c0_19] : memref<3x8x8xf32, #tpu.memory_space<vmem>>, vector<1x8x8xf32>
    %38 = vector.shape_cast %37 : vector<1x8x8xf32> to vector<8x8xf32>
    %cst_20 = arith.constant dense<0.000000e+00> : vector<8x256xf32>
    %39 = tpu.matmul %38, %0, %cst_20 {dimension_numbers = #tpu.dot_dimension_numbers<[1], [0], [0], [1], [0, 0, 1, 1], [], []>} : vector<8x8xf32>, vector<8x256xf32>, vector<8x256xf32> -> vector<8x256xf32>
    %40 = arith.addf %36, %39 : vector<8x256xf32>
    %c2_21 = arith.constant 2 : index
    %c0_22 = arith.constant 0 : index
    %c0_23 = arith.constant 0 : index
    %41 = vector.load %arg1[%c2_21, %c0_22, %c0_23] : memref<3x8x8xf32, #tpu.memory_space<vmem>>, vector<1x8x8xf32>
    %42 = vector.shape_cast %41 : vector<1x8x8xf32> to vector<8x8xf32>
    %cst_24 = arith.constant dense<0.000000e+00> : vector<8x256xf32>
    %43 = tpu.matmul %42, %27, %cst_24 {dimension_numbers = #tpu.dot_dimension_numbers<[1], [0], [0], [1], [0, 0, 1, 1], [], []>} : vector<8x8xf32>, vector<8x256xf32>, vector<8x256xf32> -> vector<8x256xf32>
    %44 = arith.addf %40, %43 : vector<8x256xf32>
    %45 = vector.broadcast %29 : vector<8x1xf32> to vector<8x256xf32>
    %46 = arith.addf %44, %45 : vector<8x256xf32>
    %cst_25 = arith.constant dense<0.000000e+00> : vector<8xf32>
    %47 = vector.multi_reduction <add>, %46, %cst_25 [1] : vector<8x256xf32> to vector<8xf32>
    %48 = vector.shape_cast %47 : vector<8xf32> to vector<8x1xf32>
    %cst_26 = arith.constant 3.906250e-03 : f32
    %49 = vector.broadcast %cst_26 : f32 to vector<8x1xf32>
    %50 = arith.mulf %48, %49 : vector<8x1xf32>
    %51 = vector.broadcast %50 : vector<8x1xf32> to vector<8x256xf32>
    %52 = arith.subf %46, %51 : vector<8x256xf32>
    %53 = arith.mulf %52, %52 : vector<8x256xf32>
    %cst_27 = arith.constant dense<0.000000e+00> : vector<8xf32>
    %54 = vector.multi_reduction <add>, %53, %cst_27 [1] : vector<8x256xf32> to vector<8xf32>
    %55 = vector.shape_cast %54 : vector<8xf32> to vector<8x1xf32>
    %cst_28 = arith.constant 3.906250e-03 : f32
    %56 = vector.broadcast %cst_28 : f32 to vector<8x1xf32>
    %57 = arith.mulf %55, %56 : vector<8x1xf32>
    %cst_29 = arith.constant 9.99999974E-6 : f32
    %58 = vector.broadcast %cst_29 : f32 to vector<8x1xf32>
    %59 = arith.addf %57, %58 : vector<8x1xf32>
    %60 = math.rsqrt %59 : vector<8x1xf32>
    %61 = arith.mulf %31, %60 : vector<8x1xf32>
    %62 = vector.broadcast %61 : vector<8x1xf32> to vector<8x256xf32>
    %63 = arith.mulf %52, %62 : vector<8x256xf32>
    %64 = vector.broadcast %33 : vector<8x1xf32> to vector<8x256xf32>
    %65 = arith.addf %63, %64 : vector<8x256xf32>
    %cst_30 = arith.constant 0.000000e+00 : f32
    %66 = vector.broadcast %cst_30 : f32 to vector<8x256xf32>
    %67 = arith.maximumf %65, %66 : vector<8x256xf32>
    %c0_31 = arith.constant 0 : index
    %c0_32 = arith.constant 0 : index
    %68 = vector.load %arg3[%c0_31, %c0_32] : memref<8x256xf32, #tpu.memory_space<vmem>>, vector<8x256xf32>
    tpu.vector_store %arg3[%c0_31, %c0_32], %67 {strides = array<i32>} : memref<8x256xf32, #tpu.memory_space<vmem>>, vector<8x256xf32>,
    return
  }
}

</mosaic_0001>

<llo_original>
// kernel: transformer_forward.1
$region0: #{transformer_forward.1}
  #allocation0 [shape = 'u32[]', space=smem, size = 0x4, offset = 0x4, fixed_abs, tag = 'smem constant byte address 0x4 - core index']
  #allocation1 [shape = 'u32[72,128]{1,0:T(1,128)}', space=vmem, size = 0x9000, scoped, tag = 'internal scratch']
  %s0 = inlined_call_operand.vmem [shape: f32[8,256], index: 0, kind: input, shape index: {}]
  %s1 = inlined_call_operand.vmem [shape: f32[3,8,8], index: 1, kind: input, shape index: {}]
  %s2 = inlined_call_operand.vmem [shape: f32[3,8,1], index: 2, kind: input, shape index: {}]
  %s3 = inlined_call_operand.vmem [shape: f32[8,256], index: 3, kind: output, shape index: {}]
  %s4 = sld [smem:[#allocation0]]
  $region22: #{transformer_forward.1} parent=0
    _
  %s6 = ssub.s32 1, %s4
  %s7 = scalar_select 0, %s6, %s4
  // Predicated region
  $region2: #{transformer_forward.1} parent=0 // pred_check
    _
  $region3: #{transformer_forward.1} parent=0 // pred_check_branch
    %9 = sbr.rel (0) target = $region5
  $region4: #{transformer_forward.1} parent=0 // pred_region
    _
  $region5: #{transformer_forward.1} parent=0 // pred_fallthru
    _
  // Predicated region
  $region6: #{transformer_forward.1} parent=0 // pred_check
    _
  $region7: #{transformer_forward.1} parent=0 // pred_check_branch
    %11 = sbr.rel (0) target = $region9
  $region8: #{transformer_forward.1} parent=0 // pred_region
    _
  $region9: #{transformer_forward.1} parent=0 // pred_fallthru
    _
  // Predicated region
  $region10: #{transformer_forward.1} parent=0 // pred_check
    _
  $region11: #{transformer_forward.1} parent=0 // pred_check_branch
    %13 = sbr.rel (0) target = $region13
  $region12: #{transformer_forward.1} parent=0 // pred_region
    _
  $region13: #{transformer_forward.1} parent=0 // pred_fallthru
    _
  %v14 = vld [vmem:[%s0] sm:$0xff]
  %v15 = vld [vmem:[%s0 + $0x8] sm:$0xff]
  %v16 = vlaneseq
  %v17 = vand.u32 %v16, 127
  %v18 = vadd.s32 %v17, 128
  %vm19 = vcmp.lt.s32.totalorder %v17, 0
  %v20 = vsub.s32 0, %v17
  %v21 = vsel %vm19, %v20, %v17
  %v22 = vshrl.u32 %v21, 7
  %v23 = vand.u32 %v21, 127
  %v24 = vsub.s32 0, %v23
  %v25 = vsel %vm19, %v24, %v23
  %vm26 = vcmp.lt.s32.totalorder %v18, 0
  %v27 = vsub.s32 0, %v18
  %v28 = vsel %vm26, %v27, %v18
  %v29 = vshrl.u32 %v28, 7
  %v30 = vand.u32 %v28, 127
  %v31 = vsub.s32 0, %v30
  %v32 = vsel %vm26, %v31, %v30
  %vm33 = vcmp.ne.s32.totalorder %v25, 0
  %vm34 = vcmp.ne.s32.totalorder %v32, 0
  %vm35 = vcmp.lt.s32.totalorder %v25, 0
  %vm36 = vcmp.lt.s32.totalorder %v32, 0
  %vm37 = vmand %vm35, %vm33
  %vm38 = vmand %vm36, %vm34
  %v39 = vadd.s32 %v25, 128
  %v40 = vadd.s32 %v32, 128
  %v41 = vsel %vm37, %v39, %v25
  %v42 = vsel %vm38, %v40, %v32
  %vm43 = vcmp.ge.s32.totalorder %v41, 16
  %vm44 = vcmp.ge.s32.totalorder %v42, 16
  %45 = vrot.lane.b32.xlu0 %v14, 16
  %v46 = vpop.permute.xlu0 %45
  %47 = vrot.lane.b32.xlu0 %v15, 16
  %v48 = vpop.permute.xlu0 %47
  %vm49 = vcmp.lt.s32.totalorder %v17, 16
  %v50 = vsel %vm49, %v46, %v48
  %v51 = vsel %vm49, %v48, %v46
  %v52 = vsel %vm43, %v51, 0.0
  %v53 = vsel %vm44, %v50, 0.0
  %vm54 = vcmp.lt.s32.totalorder %v41, 112
  %vm55 = vcmp.lt.s32.totalorder %v42, 112
  %56 = vrot.lane.b32.xlu0 %v14, 112
  %v57 = vpop.permute.xlu0 %56
  %58 = vrot.lane.b32.xlu0 %v15, 112
  %v59 = vpop.permute.xlu0 %58
  %vm60 = vcmp.lt.s32.totalorder %v17, 112
  %v61 = vsel %vm60, %v57, %v59
  %v62 = vsel %vm60, %v59, %v57
  %v63 = vsel %vm54, %v61, 0.0
  %v64 = vsel %vm55, %v62, 0.0
  %v65 = vld [vmem:[%s2] sm:$0xff]
  %s66 = scalar_lea.vmem %s2, 8
  %v67 = vld [vmem:[%s66] sm:$0xff]
  %s68 = scalar_lea.vmem %s2, 16
  %v69 = vld [vmem:[%s68] sm:$0xff]
  %v70 = vld [vmem:[%s1] sm:$0xff]
  %s71 = scalar_lea.vmem %s1, 8
  %v72 = vld [vmem:[%s71] sm:$0xff]
  %vm73 = vcmask 64512
  %v75 = vsel %vm73, %v72, 0
  %77 = vmatpush.msra.mxu0 0.0
  %78 = vmatpush.msra.mxu0 0.0
  %79 = vmatpush.msra.mxu0 0.0
  %80 = vmatpush.msra.mxu0 0.0
  %81 = vmatpush.msra.mxu0 0.0
  %82 = vmatpush.msra.mxu0 0.0
  %83 = vmatpush.msra.mxu0 0.0
  %84 = vmatpush.msra.mxu0 0.0
  %85 = vmatpush.msra.mxu0 0.0
  %86 = vmatpush.msra.mxu0 0.0
  %87 = vmatpush.msra.mxu0 0.0
  %88 = vmatpush.msra.mxu0 0.0
  %89 = vmatpush.msra.mxu0 0.0
  %90 = vmatpush.msra.mxu0 0.0
  %91 = vmatpush.msra.mxu0 0.0
  %92 = vmatpush.msra.mxu0 %v14
  %93 = vmatmul.f32.gmra.mxu0 %v75
  %v94 = vpop.f32.mrf.mxu0
  %v95 = vadd.f32 0.0, %v94
  %96 = vdwg.mxu0
  %97 = vmatpush.msra.mxu0 0.0
  %98 = vmatpush.msra.mxu0 0.0
  %99 = vmatpush.msra.mxu0 0.0
  %100 = vmatpush.msra.mxu0 0.0
  %101 = vmatpush.msra.mxu0 0.0
  %102 = vmatpush.msra.mxu0 0.0
  %103 = vmatpush.msra.mxu0 0.0
  %104 = vmatpush.msra.mxu0 0.0
  %105 = vmatpush.msra.mxu0 0.0
  %106 = vmatpush.msra.mxu0 0.0
  %107 = vmatpush.msra.mxu0 0.0
  %108 = vmatpush.msra.mxu0 0.0
  %109 = vmatpush.msra.mxu0 0.0
  %110 = vmatpush.msra.mxu0 0.0
  %111 = vmatpush.msra.mxu0 0.0
  %112 = vmatpush.msra.mxu0 %v15
  %113 = vmatmul.f32.gmra.mxu0 %v75
  %v114 = vpop.f32.mrf.mxu0
  %v115 = vadd.f32 0.0, %v114
  %116 = vdwg.mxu0
  %v118 = vsel %vm73, %v70, 0
  %120 = vmatpush.msra.mxu0 0.0
  %121 = vmatpush.msra.mxu0 0.0
  %122 = vmatpush.msra.mxu0 0.0
  %123 = vmatpush.msra.mxu0 0.0
  %124 = vmatpush.msra.mxu0 0.0
  %125 = vmatpush.msra.mxu0 0.0
  %126 = vmatpush.msra.mxu0 0.0
  %127 = vmatpush.msra.mxu0 0.0
  %128 = vmatpush.msra.mxu0 0.0
  %129 = vmatpush.msra.mxu0 0.0
  %130 = vmatpush.msra.mxu0 0.0
  %131 = vmatpush.msra.mxu0 0.0
  %132 = vmatpush.msra.mxu0 0.0
  %133 = vmatpush.msra.mxu0 0.0
  %134 = vmatpush.msra.mxu0 0.0
  %135 = vmatpush.msra.mxu0 %v52
  %136 = vmatmul.f32.gmra.mxu0 %v118
  %v137 = vpop.f32.mrf.mxu0
  %v138 = vadd.f32 %v95, %v137
  %139 = vdwg.mxu0
  %140 = vmatpush.msra.mxu0 0.0
  %141 = vmatpush.msra.mxu0 0.0
  %142 = vmatpush.msra.mxu0 0.0
  %143 = vmatpush.msra.mxu0 0.0
  %144 = vmatpush.msra.mxu0 0.0
  %145 = vmatpush.msra.mxu0 0.0
  %146 = vmatpush.msra.mxu0 0.0
  %147 = vmatpush.msra.mxu0 0.0
  %148 = vmatpush.msra.mxu0 0.0
  %149 = vmatpush.msra.mxu0 0.0
  %150 = vmatpush.msra.mxu0 0.0
  %151 = vmatpush.msra.mxu0 0.0
  %152 = vmatpush.msra.mxu0 0.0
  %153 = vmatpush.msra.mxu0 0.0
  %154 = vmatpush.msra.mxu0 0.0
  %155 = vmatpush.msra.mxu0 %v53
  %156 = vmatmul.f32.gmra.mxu0 %v118
  %v157 = vpop.f32.mrf.mxu0
  %v158 = vadd.f32 %v115, %v157
  %159 = vdwg.mxu0
  %s160 = scalar_lea.vmem %s1, 16
  %v161 = vld [vmem:[%s160] sm:$0xff]
  %v163 = vsel %vm73, %v161, 0
  %165 = vmatpush.msra.mxu0 0.0
  %166 = vmatpush.msra.mxu0 0.0
  %167 = vmatpush.msra.mxu0 0.0
  %168 = vmatpush.msra.mxu0 0.0
  %169 = vmatpush.msra.mxu0 0.0
  %170 = vmatpush.msra.mxu0 0.0
  %171 = vmatpush.msra.mxu0 0.0
  %172 = vmatpush.msra.mxu0 0.0
  %173 = vmatpush.msra.mxu0 0.0
  %174 = vmatpush.msra.mxu0 0.0
  %175 = vmatpush.msra.mxu0 0.0
  %176 = vmatpush.msra.mxu0 0.0
  %177 = vmatpush.msra.mxu0 0.0
  %178 = vmatpush.msra.mxu0 0.0
  %179 = vmatpush.msra.mxu0 0.0
  %180 = vmatpush.msra.mxu0 %v63
  %181 = vmatmul.f32.gmra.mxu0 %v163
  %v182 = vpop.f32.mrf.mxu0
  %v183 = vadd.f32 0.0, %v182
  %184 = vdwg.mxu0
  %185 = vmatpush.msra.mxu0 0.0
  %186 = vmatpush.msra.mxu0 0.0
  %187 = vmatpush.msra.mxu0 0.0
  %188 = vmatpush.msra.mxu0 0.0
  %189 = vmatpush.msra.mxu0 0.0
  %190 = vmatpush.msra.mxu0 0.0
  %191 = vmatpush.msra.mxu0 0.0
  %192 = vmatpush.msra.mxu0 0.0
  %193 = vmatpush.msra.mxu0 0.0
  %194 = vmatpush.msra.mxu0 0.0
  %195 = vmatpush.msra.mxu0 0.0
  %196 = vmatpush.msra.mxu0 0.0
  %197 = vmatpush.msra.mxu0 0.0
  %198 = vmatpush.msra.mxu0 0.0
  %199 = vmatpush.msra.mxu0 0.0
  %200 = vmatpush.msra.mxu0 %v64
  %201 = vmatmul.f32.gmra.mxu0 %v163
  %v202 = vpop.f32.mrf.mxu0
  %v203 = vadd.f32 0.0, %v202
  %204 = vdwg.mxu0
  %v205 = vadd.f32 %v138, %v183
  %v206 = vadd.f32 %v158, %v203
  %208 = vset.pattern.permute.xlu0 0
  %209 = vperm.xlu0 %208, %v65
  %v210 = vpop.permute.xlu0 %209
  %v212 = vadd.f32 %v205, %v210
  %v213 = vadd.f32 %v206, %v210
  %v214 = vadd.f32 %v212, %v213
  %215 = vadd.xlane.f32.xlu0 %v214
  %v216 = vpop.xlane.xlu0 %215
  %v217 = vmul.f32 %v216, 0.00390625
  %v218 = vsub.f32 %v212, %v217
  %v219 = vsub.f32 %v213, %v217
  %v220 = vmul.f32 %v218, %v218
  %v221 = vmul.f32 %v219, %v219
  %v222 = vadd.f32 %v220, %v221
  %223 = vadd.xlane.f32.xlu0 %v222
  %v224 = vpop.xlane.xlu0 %223
  %v225 = vmul.f32 %v224, 0.00390625
  %v226 = vadd.f32 %v225, 1e-05
  %v227 = vrsqrt.pop %v226
  %v228 = vmul.f32 %v227, %v226
  %v229 = vmul.f32 %v228, %v227
  %v230 = vmul.f32 0.5, %v229
  %v231 = vsub.f32 1.5, %v230
  %v232 = vmul.f32 %v227, %v231
  %vm233 = vweird.f32 %v226
  %vm234 = vweird.f32 %v227
  %vm235 = vmor %vm233, %vm234
  %v236 = vsel %vm235, %v227, %v232
  %v237 = vmul.f32 %v67, %v236
  %239 = vset.pattern.permute.xlu0 0
  %240 = vperm.xlu0 %239, %v237
  %v241 = vpop.permute.xlu0 %240
  %v243 = vmul.f32 %v218, %v241
  %v244 = vmul.f32 %v219, %v241
  %246 = vset.pattern.permute.xlu0 0
  %247 = vperm.xlu0 %246, %v69
  %v248 = vpop.permute.xlu0 %247
  %v250 = vadd.f32 %v243, %v248
  %v251 = vadd.f32 %v244, %v248
  %v252 = vmax.f32 %v250, 0.0
  %v253 = vmax.f32 %v251, 0.0
  %254 = vst [vmem:[%s3] sm:$0xff] %v252
  %255 = vst [vmem:[%s3 + $0x8] sm:$0xff] %v253
  // Predicated region
  $region14: #{transformer_forward.1} parent=0 // pred_check
    _
  $region15: #{transformer_forward.1} parent=0 // pred_check_branch
    %257 = sbr.rel (0) target = $region17
  $region16: #{transformer_forward.1} parent=0 // pred_region
    _
  $region17: #{transformer_forward.1} parent=0 // pred_fallthru
    _
  // Predicated region
  $region18: #{transformer_forward.1} parent=0 // pred_check
    _
  $region19: #{transformer_forward.1} parent=0 // pred_check_branch
    %259 = sbr.rel (0) target = $region21
  $region20: #{transformer_forward.1} parent=0 // pred_region
    _
  $region21: #{transformer_forward.1} parent=0 // pred_fallthru
    _

</llo_original>
